<compile_context>
chip_gen: v7x
topology: tpu7x:2x2x1
jax: 0.10.0
libtpu: 0.0.40
codegen_flags: <defaults>
</compile_context>

<pallas_src>
import math

import jax
import jax.numpy as jnp
from jax.experimental import pallas as pl
from jax.experimental.pallas import tpu as pltpu

_LANE = 128
_INV_SQRT2 = 0.7071067811865476


def _round_up(v: int, m: int) -> int:
    return ((v + m - 1) // m) * m


def _gelu_exact(x):
    # nn.GELU() default = exact erf-based GELU. Computed in x's dtype
    # (f32 stays f32; bf16 stays bf16 -> bf16 VPU/EUP on v6e/v7x).
    return x * 0.5 * (1.0 + jax.lax.erf(x * _INV_SQRT2))


def _resnet_block_kernel(x_ref, w1_ref, b1_ref, w2_ref, b2_ref, o_ref):
    in_dt = x_ref.dtype
    f32 = jnp.float32

    h = _gelu_exact(x_ref[...])                                   # input dtype
    h = jnp.dot(h, w1_ref[...], preferred_element_type=f32)       # f32 accum
    h = (h + b1_ref[...].astype(f32)).astype(in_dt)
    h = _gelu_exact(h)
    h = jnp.dot(h, w2_ref[...], preferred_element_type=f32)
    h = h + b2_ref[...].astype(f32)
    # Residual: re-read x_ref here instead of holding a copy live across
    # both matmuls.
    o_ref[...] = (h + x_ref[...].astype(f32)).astype(o_ref.dtype)


def pseudo_residue_resnet_block(x, w1, b1, w2, b2):
    """x: [..., c_hidden]; w1/w2: [c, c] laid out so y = x @ w + b matches
    PyTorch's x @ W.T + b; b1/b2: [c]."""
    orig_shape = x.shape
    c = x.shape[-1]
    lead = x.shape[:-1]
    n = int(math.prod(lead)) if lead else 1
    dtype = x.dtype
    itemsize = jnp.dtype(dtype).itemsize
    # dtype-packed sublane granularity: 8 for f32, 16 for bf16, 32 for int8/fp8.
    sublane = 8 * max(1, 4 // itemsize)

    x2d = x.reshape(n, c)

    pack = 1
    if c % _LANE == 0:
        # Already lane-dense: no padding, no packing, no post-slice.
        lane_c = c
        n_rows = n
        x_in = x2d
        w1p, w2p = w1, w2
        b1p, b2p = b1.reshape(1, c), b2.reshape(1, c)
    elif c < _LANE and _LANE % c == 0:
        # Pack k rows into one lane-dense 128-wide row (free reshape when
        # n % k == 0); weights become block-diagonal, biases are tiled.
        pack = _LANE // c
        lane_c = _LANE
        n_k = _round_up(n, pack)
        if n_k != n:
            x2d = jnp.pad(x2d, ((0, n_k - n), (0, 0)))
        x_in = x2d.reshape(n_k // pack, lane_c)
        n_rows = n_k // pack
        eye = jnp.eye(pack, dtype=w1.dtype)
        w1p = jnp.kron(eye, w1)
        w2p = jnp.kron(eye, w2)
        b1p = jnp.tile(b1, pack).reshape(1, lane_c)
        b2p = jnp.tile(b2, pack).reshape(1, lane_c)
    else:
        # General fallback: zero-pad channels to a lane multiple (zero padding
        # is exact here: GELU(0)=0 and padded weight rows / bias lanes are 0).
        lane_c = _round_up(c, _LANE)
        x_in = jnp.pad(x2d, ((0, 0), (0, lane_c - c)))
        n_rows = n
        w1p = jnp.pad(w1, ((0, lane_c - c), (0, lane_c - c)))
        w2p = jnp.pad(w2, ((0, lane_c - c), (0, lane_c - c)))
        b1p = jnp.pad(b1, (0, lane_c - c)).reshape(1, lane_c)
        b2p = jnp.pad(b2, (0, lane_c - c)).reshape(1, lane_c)

    # --- row tile: ~1 MiB of x per tile, capped at 2048 rows ---------------
    tm = max(sublane, min(2048, (1 << 20) // max(1, lane_c * itemsize)))
    tm = _round_up(tm, sublane)
    if n_rows > sublane:
        # Guarantee >= 2 grid steps (v7x has 2 TensorCores; also keeps the
        # DMA pipeline overlapped for small/medium N).
        num_steps = max(2, pl.cdiv(n_rows, tm))
        tm = _round_up(pl.cdiv(n_rows, num_steps), sublane)
    if tm >= n_rows:
        tm = n_rows  # single full-extent block (always a legal block dim)

    # --- VMEM budget: generation-aware limit with headroom ------------------
    try:
        vmem_cap = int(pltpu.get_tpu_info().vmem_capacity_bytes)
    except Exception:
        vmem_cap = 64 * 1024 * 1024
    vmem_budget = (vmem_cap * 3) // 4   # ~96 MiB v5e/v6e, ~48 MiB v7x

    w_itemsize = jnp.dtype(w1p.dtype).itemsize
    w_bytes = 2 * lane_c * lane_c * w_itemsize          # resident w1 + w2

    def _need(tm_):
        return (
            2 * tm_ * lane_c * itemsize       # x tile (double-buffered)
            + 2 * tm_ * lane_c * itemsize     # out tile (double-buffered)
            + w_bytes
            + 4 * lane_c * itemsize           # biases
            + 3 * tm_ * lane_c * 4            # f32 intermediates headroom
        )

    while tm > sublane and _need(tm) > vmem_budget:
        tm = max(sublane, _round_up(tm // 2, sublane))
        if tm >= n_rows:
            tm = n_rows

    vmem_limit = int(min(max(_need(tm) + (8 << 20), 16 * 1024 * 1024),
                         vmem_budget))

    grid = (pl.cdiv(n_rows, tm),)

    cost = pl.CostEstimate(
        flops=4 * n_rows * lane_c * lane_c,           # two [TM,C]x[C,C] matmuls
        transcendentals=2 * n_rows * lane_c,          # two GELUs (erf)
        bytes_accessed=(2 * n_rows * lane_c + 2 * lane_c * lane_c + 2 * lane_c)
        * itemsize,
    )

    def _call(single_buffer_consts):
        const_kw = (
            dict(pipeline_mode=pl.Buffered(1)) if single_buffer_consts else {}
        )
        w_spec = pl.BlockSpec((lane_c, lane_c), lambda i: (0, 0), **const_kw)
        b_spec = pl.BlockSpec((1, lane_c), lambda i: (0, 0), **const_kw)
        return pl.pallas_call(
            _resnet_block_kernel,
            out_shape=jax.ShapeDtypeStruct((n_rows, lane_c), dtype),
            grid=grid,
            in_specs=[
                pl.BlockSpec((tm, lane_c), lambda i: (i, 0)),  # x (pipelined)
                w_spec,                                        # w1 (resident)
                b_spec,                                        # b1
                w_spec,                                        # w2 (resident)
                b_spec,                                        # b2
            ],
            out_specs=pl.BlockSpec((tm, lane_c), lambda i: (i, 0)),
            compiler_params=pltpu.CompilerParams(
                dimension_semantics=("parallel",),
                vmem_limit_bytes=vmem_limit,
            ),
            cost_estimate=cost,
        )(x_in, w1p, b1p, w2p, b2p)

    try:
        out = _call(True)
    except Exception:
        # Older JAX without pipeline_mode / Buffered(1): default buffering.
        out = _call(False)

    if pack > 1:
        out = out.reshape(n_rows * pack, c)
        if n_rows * pack != n:
            out = out[:n]
    elif lane_c != c:
        out = out[:, :c]
    return out.reshape(orig_shape)


def _reference(x, w1, b1, w2, b2):
    f = x.astype(jnp.float32)
    h = _gelu_exact(f)
    h = h @ w1.astype(jnp.float32) + b1.astype(jnp.float32)
    h = _gelu_exact(h)
    h = h @ w2.astype(jnp.float32) + b2.astype(jnp.float32)
    return h + f


if __name__ == "__main__":
    key = jax.random.PRNGKey(0)

    def _make(k, shape, dtype):
        c = shape[-1]
        kx, kw1, kb1, kw2, kb2 = jax.random.split(k, 5)
        s = c ** -0.5
        x = jax.random.normal(kx, shape, dtype=jnp.float32).astype(dtype)
        w1 = (jax.random.normal(kw1, (c, c), jnp.float32) * s).astype(dtype)
        b1 = (jax.random.normal(kb1, (c,), jnp.float32) * 0.1).astype(dtype)
        w2 = (jax.random.normal(kw2, (c, c), jnp.float32) * s).astype(dtype)
        b2 = (jax.random.normal(kb2, (c,), jnp.float32) * 0.1).astype(dtype)
        return x, w1, b1, w2, b2

    cases = [
        # (shape, dtype, atol, rtol)  -- c_hidden = shape[-1]
        ((2, 8, 32), jnp.float32, 1e-5, 1e-5),     # packed path, N % 4 == 0
        ((3, 37, 32), jnp.float32, 1e-5, 1e-5),    # packed path, ragged N
        ((4, 9, 128), jnp.float32, 1e-5, 1e-5),    # lane-dense, ragged row grid
        ((2, 5, 48), jnp.float32, 1e-5, 1e-5),     # zero-pad fallback path
        ((2, 8, 32), jnp.bfloat16, 1e-1, 5e-2),    # bf16 path (bf16 MXU/GELU)
    ]

    for idx, (shape, dtype, atol, rtol) in enumerate(cases):
        sub = jax.random.fold_in(key, idx)
        x, w1, b1, w2, b2 = _make(sub, shape, dtype)
        out = pseudo_residue_resnet_block(x, w1, b1, w2, b2)
        jax.block_until_ready(out)
        ref = _reference(x, w1, b1, w2, b2)
        assert out.shape == x.shape, (out.shape, x.shape)
        ok = jnp.allclose(out.astype(jnp.float32), ref.astype(jnp.float32),
                          atol=atol, rtol=rtol)
        assert ok, f"mismatch vs reference in case {idx}: shape={shape}, dtype={dtype}"

    print("KERNEL_OK")
</pallas_src>

<mosaic_0001>
module attributes {stable_mosaic.version = 11 : i64} {
  func.func @_resnet_block_kernel(%arg0: i32, %arg1: memref<4x128xf32, #tpu.memory_space<vmem>>, %arg2: memref<128x128xf32, #tpu.memory_space<vmem>>, %arg3: memref<1x128xf32, #tpu.memory_space<vmem>>, %arg4: memref<128x128xf32, #tpu.memory_space<vmem>>, %arg5: memref<1x128xf32, #tpu.memory_space<vmem>>, %arg6: memref<4x128xf32, #tpu.memory_space<vmem>>) attributes {dimension_semantics = [#tpu.dimension_semantics<parallel>], iteration_bounds = array<i64: 1>, scalar_prefetch = 0 : i64, scratch_operands = 0 : i64, tpu.core_type = #tpu.core_type<tc>, window_params = [{transform_indices = @transform_0, window_bounds = array<i64: 4, 128>}, {pipeline_mode = #tpu.pipeline_mode<synchronous>, transform_indices = @transform_1, window_bounds = array<i64: 128, 128>}, {pipeline_mode = #tpu.pipeline_mode<synchronous>, transform_indices = @transform_2, window_bounds = array<i64: 1, 128>}, {pipeline_mode = #tpu.pipeline_mode<synchronous>, transform_indices = @transform_3, window_bounds = array<i64: 128, 128>}, {pipeline_mode = #tpu.pipeline_mode<synchronous>, transform_indices = @transform_4, window_bounds = array<i64: 1, 128>}, {transform_indices = @transform_5, window_bounds = array<i64: 4, 128>}]} {
    %c0 = arith.constant 0 : index
    %c0_0 = arith.constant 0 : index
    %0 = vector.load %arg1[%c0, %c0_0] : memref<4x128xf32, #tpu.memory_space<vmem>>, vector<4x128xf32>
    %cst = arith.constant 5.000000e-01 : f32
    %1 = vector.broadcast %cst : f32 to vector<4x128xf32>
    %2 = arith.mulf %0, %1 : vector<4x128xf32>
    %cst_1 = arith.constant 0.707106769 : f32
    %3 = vector.broadcast %cst_1 : f32 to vector<4x128xf32>
    %4 = arith.mulf %0, %3 : vector<4x128xf32>
    %5 = math.erf %4 : vector<4x128xf32>
    %cst_2 = arith.constant 1.000000e+00 : f32
    %6 = vector.broadcast %cst_2 : f32 to vector<4x128xf32>
    %7 = arith.addf %6, %5 : vector<4x128xf32>
    %8 = arith.mulf %2, %7 : vector<4x128xf32>
    %c0_3 = arith.constant 0 : index
    %c0_4 = arith.constant 0 : index
    %9 = vector.load %arg2[%c0_3, %c0_4] : memref<128x128xf32, #tpu.memory_space<vmem>>, vector<128x128xf32>
    %cst_5 = arith.constant dense<0.000000e+00> : vector<4x128xf32>
    %10 = tpu.matmul %8, %9, %cst_5 {dimension_numbers = #tpu.dot_dimension_numbers<[1], [0], [0], [1], [0, 0, 1, 1], [], []>} : vector<4x128xf32>, vector<128x128xf32>, vector<4x128xf32> -> vector<4x128xf32>
    %c0_6 = arith.constant 0 : index
    %c0_7 = arith.constant 0 : index
    %11 = vector.load %arg3[%c0_6, %c0_7] : memref<1x128xf32, #tpu.memory_space<vmem>>, vector<1x128xf32>
    %12 = vector.broadcast %11 : vector<1x128xf32> to vector<4x128xf32>
    %13 = arith.addf %10, %12 : vector<4x128xf32>
    %cst_8 = arith.constant 5.000000e-01 : f32
    %14 = vector.broadcast %cst_8 : f32 to vector<4x128xf32>
    %15 = arith.mulf %13, %14 : vector<4x128xf32>
    %cst_9 = arith.constant 0.707106769 : f32
    %16 = vector.broadcast %cst_9 : f32 to vector<4x128xf32>
    %17 = arith.mulf %13, %16 : vector<4x128xf32>
    %18 = math.erf %17 : vector<4x128xf32>
    %cst_10 = arith.constant 1.000000e+00 : f32
    %19 = vector.broadcast %cst_10 : f32 to vector<4x128xf32>
    %20 = arith.addf %19, %18 : vector<4x128xf32>
    %21 = arith.mulf %15, %20 : vector<4x128xf32>
    %c0_11 = arith.constant 0 : index
    %c0_12 = arith.constant 0 : index
    %22 = vector.load %arg4[%c0_11, %c0_12] : memref<128x128xf32, #tpu.memory_space<vmem>>, vector<128x128xf32>
    %cst_13 = arith.constant dense<0.000000e+00> : vector<4x128xf32>
    %23 = tpu.matmul %21, %22, %cst_13 {dimension_numbers = #tpu.dot_dimension_numbers<[1], [0], [0], [1], [0, 0, 1, 1], [], []>} : vector<4x128xf32>, vector<128x128xf32>, vector<4x128xf32> -> vector<4x128xf32>
    %c0_14 = arith.constant 0 : index
    %c0_15 = arith.constant 0 : index
    %24 = vector.load %arg5[%c0_14, %c0_15] : memref<1x128xf32, #tpu.memory_space<vmem>>, vector<1x128xf32>
    %25 = vector.broadcast %24 : vector<1x128xf32> to vector<4x128xf32>
    %26 = arith.addf %23, %25 : vector<4x128xf32>
    %c0_16 = arith.constant 0 : index
    %c0_17 = arith.constant 0 : index
    %27 = vector.load %arg1[%c0_16, %c0_17] : memref<4x128xf32, #tpu.memory_space<vmem>>, vector<4x128xf32>
    %28 = arith.addf %26, %27 : vector<4x128xf32>
    %c0_18 = arith.constant 0 : index
    %c0_19 = arith.constant 0 : index
    %29 = vector.load %arg6[%c0_18, %c0_19] : memref<4x128xf32, #tpu.memory_space<vmem>>, vector<4x128xf32>
    tpu.vector_store %arg6[%c0_18, %c0_19], %28 {strides = array<i32>} : memref<4x128xf32, #tpu.memory_space<vmem>>, vector<4x128xf32>,
    return
  }
  func.func @transform_0(%arg0: i32) -> (i32, i32) {
    %c0_i32 = arith.constant 0 : i32
    %c0_i32_0 = arith.constant 0 : i32
    return %arg0, %c0_i32 : i32, i32
  }
  func.func @transform_1(%arg0: i32) -> (i32, i32) {
    %c0_i32 = arith.constant 0 : i32
    %c0_i32_0 = arith.constant 0 : i32
    %c0_i32_1 = arith.constant 0 : i32
    return %c0_i32, %c0_i32_0 : i32, i32
  }
  func.func @transform_2(%arg0: i32) -> (i32, i32) {
    %c0_i32 = arith.constant 0 : i32
    %c0_i32_0 = arith.constant 0 : i32
    %c0_i32_1 = arith.constant 0 : i32
    return %c0_i32, %c0_i32_0 : i32, i32
  }
  func.func @transform_3(%arg0: i32) -> (i32, i32) {
    %c0_i32 = arith.constant 0 : i32
    %c0_i32_0 = arith.constant 0 : i32
    %c0_i32_1 = arith.constant 0 : i32
    return %c0_i32, %c0_i32_0 : i32, i32
  }
  func.func @transform_4(%arg0: i32) -> (i32, i32) {
    %c0_i32 = arith.constant 0 : i32
    %c0_i32_0 = arith.constant 0 : i32
    %c0_i32_1 = arith.constant 0 : i32
    return %c0_i32, %c0_i32_0 : i32, i32
  }
  func.func @transform_5(%arg0: i32) -> (i32, i32) {
    %c0_i32 = arith.constant 0 : i32
    %c0_i32_0 = arith.constant 0 : i32
    return %arg0, %c0_i32 : i32, i32
  }
}

module attributes {stable_mosaic.version = 11 : i64} {
  func.func @_resnet_block_kernel(%arg0: i32, %arg1: memref<4x128xf32, #tpu.memory_space<vmem>>, %arg2: memref<128x128xf32, #tpu.memory_space<vmem>>, %arg3: memref<1x128xf32, #tpu.memory_space<vmem>>, %arg4: memref<128x128xf32, #tpu.memory_space<vmem>>, %arg5: memref<1x128xf32, #tpu.memory_space<vmem>>, %arg6: memref<4x128xf32, #tpu.memory_space<vmem>>) attributes {dimension_semantics = [#tpu.dimension_semantics<parallel>], iteration_bounds = array<i64: 1>, scalar_prefetch = 0 : i64, scratch_operands = 0 : i64, tpu.core_type = #tpu.core_type<tc>, window_params = [{transform_indices = @transform_0, window_bounds = array<i64: 4, 128>}, {pipeline_mode = #tpu.pipeline_mode<synchronous>, transform_indices = @transform_1, window_bounds = array<i64: 128, 128>}, {pipeline_mode = #tpu.pipeline_mode<synchronous>, transform_indices = @transform_2, window_bounds = array<i64: 1, 128>}, {pipeline_mode = #tpu.pipeline_mode<synchronous>, transform_indices = @transform_3, window_bounds = array<i64: 128, 128>}, {pipeline_mode = #tpu.pipeline_mode<synchronous>, transform_indices = @transform_4, window_bounds = array<i64: 1, 128>}, {transform_indices = @transform_5, window_bounds = array<i64: 4, 128>}]} {
    %c0 = arith.constant 0 : index
    %c0_0 = arith.constant 0 : index
    %0 = vector.load %arg1[%c0, %c0_0] : memref<4x128xf32, #tpu.memory_space<vmem>>, vector<4x128xf32>
    %cst = arith.constant 5.000000e-01 : f32
    %1 = vector.broadcast %cst : f32 to vector<4x128xf32>
    %2 = arith.mulf %0, %1 : vector<4x128xf32>
    %cst_1 = arith.constant 0.707106769 : f32
    %3 = vector.broadcast %cst_1 : f32 to vector<4x128xf32>
    %4 = arith.mulf %0, %3 : vector<4x128xf32>
    %5 = math.erf %4 : vector<4x128xf32>
    %cst_2 = arith.constant 1.000000e+00 : f32
    %6 = vector.broadcast %cst_2 : f32 to vector<4x128xf32>
    %7 = arith.addf %6, %5 : vector<4x128xf32>
    %8 = arith.mulf %2, %7 : vector<4x128xf32>
    %c0_3 = arith.constant 0 : index
    %c0_4 = arith.constant 0 : index
    %9 = vector.load %arg2[%c0_3, %c0_4] : memref<128x128xf32, #tpu.memory_space<vmem>>, vector<128x128xf32>
    %cst_5 = arith.constant dense<0.000000e+00> : vector<4x128xf32>
    %10 = tpu.matmul %8, %9, %cst_5 {dimension_numbers = #tpu.dot_dimension_numbers<[1], [0], [0], [1], [0, 0, 1, 1], [], []>} : vector<4x128xf32>, vector<128x128xf32>, vector<4x128xf32> -> vector<4x128xf32>
    %c0_6 = arith.constant 0 : index
    %c0_7 = arith.constant 0 : index
    %11 = vector.load %arg3[%c0_6, %c0_7] : memref<1x128xf32, #tpu.memory_space<vmem>>, vector<1x128xf32>
    %12 = vector.broadcast %11 : vector<1x128xf32> to vector<4x128xf32>
    %13 = arith.addf %10, %12 : vector<4x128xf32>
    %cst_8 = arith.constant 5.000000e-01 : f32
    %14 = vector.broadcast %cst_8 : f32 to vector<4x128xf32>
    %15 = arith.mulf %13, %14 : vector<4x128xf32>
    %cst_9 = arith.constant 0.707106769 : f32
    %16 = vector.broadcast %cst_9 : f32 to vector<4x128xf32>
    %17 = arith.mulf %13, %16 : vector<4x128xf32>
    %18 = math.erf %17 : vector<4x128xf32>
    %cst_10 = arith.constant 1.000000e+00 : f32
    %19 = vector.broadcast %cst_10 : f32 to vector<4x128xf32>
    %20 = arith.addf %19, %18 : vector<4x128xf32>
    %21 = arith.mulf %15, %20 : vector<4x128xf32>
    %c0_11 = arith.constant 0 : index
    %c0_12 = arith.constant 0 : index
    %22 = vector.load %arg4[%c0_11, %c0_12] : memref<128x128xf32, #tpu.memory_space<vmem>>, vector<128x128xf32>
    %cst_13 = arith.constant dense<0.000000e+00> : vector<4x128xf32>
    %23 = tpu.matmul %21, %22, %cst_13 {dimension_numbers = #tpu.dot_dimension_numbers<[1], [0], [0], [1], [0, 0, 1, 1], [], []>} : vector<4x128xf32>, vector<128x128xf32>, vector<4x128xf32> -> vector<4x128xf32>
    %c0_14 = arith.constant 0 : index
    %c0_15 = arith.constant 0 : index
    %24 = vector.load %arg5[%c0_14, %c0_15] : memref<1x128xf32, #tpu.memory_space<vmem>>, vector<1x128xf32>
    %25 = vector.broadcast %24 : vector<1x128xf32> to vector<4x128xf32>
    %26 = arith.addf %23, %25 : vector<4x128xf32>
    %c0_16 = arith.constant 0 : index
    %c0_17 = arith.constant 0 : index
    %27 = vector.load %arg1[%c0_16, %c0_17] : memref<4x128xf32, #tpu.memory_space<vmem>>, vector<4x128xf32>
    %28 = arith.addf %26, %27 : vector<4x128xf32>
    %c0_18 = arith.constant 0 : index
    %c0_19 = arith.constant 0 : index
    %29 = vector.load %arg6[%c0_18, %c0_19] : memref<4x128xf32, #tpu.memory_space<vmem>>, vector<4x128xf32>
    tpu.vector_store %arg6[%c0_18, %c0_19], %28 {strides = array<i32>} : memref<4x128xf32, #tpu.memory_space<vmem>>, vector<4x128xf32>,
    return
  }
  func.func @transform_0(%arg0: i32) -> (i32, i32) {
    %c0_i32 = arith.constant 0 : i32
    %c0_i32_0 = arith.constant 0 : i32
    return %arg0, %c0_i32 : i32, i32
  }
  func.func @transform_1(%arg0: i32) -> (i32, i32) {
    %c0_i32 = arith.constant 0 : i32
    %c0_i32_0 = arith.constant 0 : i32
    %c0_i32_1 = arith.constant 0 : i32
    return %c0_i32, %c0_i32_0 : i32, i32
  }
  func.func @transform_2(%arg0: i32) -> (i32, i32) {
    %c0_i32 = arith.constant 0 : i32
    %c0_i32_0 = arith.constant 0 : i32
    %c0_i32_1 = arith.constant 0 : i32
    return %c0_i32, %c0_i32_0 : i32, i32
  }
  func.func @transform_3(%arg0: i32) -> (i32, i32) {
    %c0_i32 = arith.constant 0 : i32
    %c0_i32_0 = arith.constant 0 : i32
    %c0_i32_1 = arith.constant 0 : i32
    return %c0_i32, %c0_i32_0 : i32, i32
  }
  func.func @transform_4(%arg0: i32) -> (i32, i32) {
    %c0_i32 = arith.constant 0 : i32
    %c0_i32_0 = arith.constant 0 : i32
    %c0_i32_1 = arith.constant 0 : i32
    return %c0_i32, %c0_i32_0 : i32, i32
  }
  func.func @transform_5(%arg0: i32) -> (i32, i32) {
    %c0_i32 = arith.constant 0 : i32
    %c0_i32_0 = arith.constant 0 : i32
    return %arg0, %c0_i32 : i32, i32
  }
}

</mosaic_0001>

<llo_original>
// kernel: tpu_custom_call.1
$region0: #{tpu_custom_call.1}
  #allocation0 [shape = 'u32[]', space=smem, size = 0x4, offset = 0x4, fixed_abs, tag = 'smem constant byte address 0x4 - core index']
  #allocation1 [shape = 'u32[144,128]{1,0:T(1,128)}', space=vmem, size = 0x12000, scoped, tag = 'internal scratch']
  %s0 = inlined_call_operand.hbm [shape: f32[4,128], index: 0, kind: input, shape index: {}]
  %s1 = inlined_call_operand.hbm [shape: f32[128,128], index: 1, kind: input, shape index: {}]
  %s2 = inlined_call_operand.vmem [shape: f32[1,128], index: 2, kind: input, shape index: {}]
  %s3 = inlined_call_operand.hbm [shape: f32[128,128], index: 3, kind: input, shape index: {}]
  %s4 = inlined_call_operand.vmem [shape: f32[1,128], index: 4, kind: input, shape index: {}]
  %s5 = inlined_call_operand.hbm [shape: f32[4,128], index: 5, kind: output, shape index: {}]
  %s6 = sld [smem:[#allocation0]]
  $region42: #{tpu_custom_call.1} parent=0
    _
  %s8 = ssub.s32 1, %s6
  %s9 = scalar_select 0, %s8, %s6
  $region1: #{tpu_custom_call.1} parent=0
    #allocation2 [shape = 'u8[2048]{0}', space=vmem, size = 0x800, scoped, tag = 'input window, operand 0, single buffered']
    #allocation3 [shape = 's32[1]{0}', space=sflag, size = 0x4, scoped, tag = 'scoped memory for tpu_custom_call.1']
    #allocation4 [shape = 's32[1]{0}', space=sflag, size = 0x4, scoped, tag = 'scoped memory for tpu_custom_call.1']
    #allocation5 [shape = 'u8[65536]{0}', space=vmem, size = 0x10000, scoped, tag = 'input window, operand 1, single buffered']
    #allocation6 [shape = 's32[1]{0}', space=sflag, size = 0x4, scoped, tag = 'scoped memory for tpu_custom_call.1']
    #allocation7 [shape = 'u8[65536]{0}', space=vmem, size = 0x10000, scoped, tag = 'input window, operand 3, single buffered']
    #allocation8 [shape = 'u8[2048]{0}', space=vmem, size = 0x800, scoped, tag = 'output window, operand 0, single buffered']
    %10 = vsyncpa [#allocation3], 0
    %11 = vsyncpa [#allocation6], 0
    %12 = vsyncpa [#allocation4], 0
    // Predicated region
    $region2: #{tpu_custom_call.1} parent=1 // pred_check
      _
    $region3: #{tpu_custom_call.1} parent=1 // pred_check_branch
      %14 = sbr.rel (0) target = $region5
    $region4: #{tpu_custom_call.1} parent=1 // pred_region
      %s16 = ssub.s32 64, 64
      %17 = vsyncadd [#allocation3], %s16
      %s19 = sshll.u32 [#allocation2], 4
      %s20 = int_to_ptr.vmem [resolvable:$true] %s19
      %22 = dma.hbm_to_vmem [thread:$0]  %s0, 64, %s20, [#allocation3]
    $region5: #{tpu_custom_call.1} parent=1 // pred_fallthru
      _
    // Predicated region
    $region6: #{tpu_custom_call.1} parent=1 // pred_check
      _
    $region7: #{tpu_custom_call.1} parent=1 // pred_check_branch
      %24 = sbr.rel (0) target = $region9
    $region8: #{tpu_custom_call.1} parent=1 // pred_region
      %s26 = ssub.s32 2048, 2048
      %27 = vsyncadd [#allocation6], %s26
      %s28 = sshll.u32 [#allocation5], 4
      %s29 = int_to_ptr.vmem [resolvable:$true] %s28
      %34 = dma.hbm_to_vmem [thread:$0]  %s1, 2048, %s29, [#allocation6], 128, 128, 8
    $region9: #{tpu_custom_call.1} parent=1 // pred_fallthru
      _
    // Predicated region
    $region10: #{tpu_custom_call.1} parent=1 // pred_check
      _
    $region11: #{tpu_custom_call.1} parent=1 // pred_check_branch
      %36 = sbr.rel (0) target = $region13
    $region12: #{tpu_custom_call.1} parent=1 // pred_region
      _
    $region13: #{tpu_custom_call.1} parent=1 // pred_fallthru
      _
    // Predicated region
    $region14: #{tpu_custom_call.1} parent=1 // pred_check
      _
    $region15: #{tpu_custom_call.1} parent=1 // pred_check_branch
      %38 = sbr.rel (0) target = $region17
    $region16: #{tpu_custom_call.1} parent=1 // pred_region
      %s40 = ssub.s32 2048, 2048
      %41 = vsyncadd [#allocation6], %s40
      %s42 = sshll.u32 [#allocation7], 4
      %s43 = int_to_ptr.vmem [resolvable:$true] %s42
      %48 = dma.hbm_to_vmem [thread:$0]  %s3, 2048, %s43, [#allocation6], 128, 128, 8
    $region17: #{tpu_custom_call.1} parent=1 // pred_fallthru
      _
    // Predicated region
    $region18: #{tpu_custom_call.1} parent=1 // pred_check
      _
    $region19: #{tpu_custom_call.1} parent=1 // pred_check_branch
      %50 = sbr.rel (0) target = $region21
    $region20: #{tpu_custom_call.1} parent=1 // pred_region
      _
    $region21: #{tpu_custom_call.1} parent=1 // pred_fallthru
      _
    // Predicated region
    $region22: #{tpu_custom_call.1} parent=1 // pred_check
      _
    $region23: #{tpu_custom_call.1} parent=1 // pred_check_branch
      %52 = sbr.rel (0) target = $region25
    $region24: #{tpu_custom_call.1} parent=1 // pred_region
      %53 = dma.done [#allocation3], 64
    $region25: #{tpu_custom_call.1} parent=1 // pred_fallthru
      _
    // Predicated region
    $region26: #{tpu_custom_call.1} parent=1 // pred_check
      _
    $region27: #{tpu_custom_call.1} parent=1 // pred_check_branch
      %55 = sbr.rel (0) target = $region29
    $region28: #{tpu_custom_call.1} parent=1 // pred_region
      %56 = dma.done [#allocation6], 2048
    $region29: #{tpu_custom_call.1} parent=1 // pred_fallthru
      _
    // Predicated region
    $region30: #{tpu_custom_call.1} parent=1 // pred_check
      _
    $region31: #{tpu_custom_call.1} parent=1 // pred_check_branch
      %58 = sbr.rel (0) target = $region33
    $region32: #{tpu_custom_call.1} parent=1 // pred_region
      %59 = dma.done [#allocation6], 2048
    $region33: #{tpu_custom_call.1} parent=1 // pred_fallthru
      _
    %v60 = vld [vmem:[#allocation2] sm:$0xf]
    %v61 = vmul.f32 %v60, 0.5
    %v62 = vmul.f32 %v60, 0.70710677
    %v63 = verf.f32.pop %v62
    %v64 = vadd.f32 %v63, 1.0
    %v65 = vmul.f32 %v61, %v64
    %v66 = vld [vmem:[#allocation5] sm:$0xff]
    %v67 = vld [vmem:[#allocation5 + $0x8] sm:$0xff]
    %v68 = vld [vmem:[#allocation5 + $0x10] sm:$0xff]
    %v69 = vld [vmem:[#allocation5 + $0x18] sm:$0xff]
    %v70 = vld [vmem:[#allocation5 + $0x20] sm:$0xff]
    %v71 = vld [vmem:[#allocation5 + $0x28] sm:$0xff]
    %v72 = vld [vmem:[#allocation5 + $0x30] sm:$0xff]
    %v73 = vld [vmem:[#allocation5 + $0x38] sm:$0xff]
    %v74 = vld [vmem:[#allocation5 + $0x40] sm:$0xff]
    %v75 = vld [vmem:[#allocation5 + $0x48] sm:$0xff]
    %v76 = vld [vmem:[#allocation5 + $0x50] sm:$0xff]
    %v77 = vld [vmem:[#allocation5 + $0x58] sm:$0xff]
    %v78 = vld [vmem:[#allocation5 + $0x60] sm:$0xff]
    %v79 = vld [vmem:[#allocation5 + $0x68] sm:$0xff]
    %v80 = vld [vmem:[#allocation5 + $0x70] sm:$0xff]
    %v81 = vld [vmem:[#allocation5 + $0x78] sm:$0xff]
    %v82 = vld [vmem:[%s2] sm:$0x1]
    %v84 = vlaneseq
    %v85 = vshrl.u32 %v84, 7
    %v86 = vsub.s32 0, %v85
    %v87 = vrot.slane %v82, %v86
    %89 = vmatprep.subr.mxu0 0.0
    %90 = vmatpush1.msra.mxu0 %v66
    %91 = vmatprep.subr.mxu0 0.0
    %92 = vmatpush1.msra.mxu0 %v67
    %93 = vmatprep.subr.mxu0 0.0
    %94 = vmatpush1.msra.mxu0 %v68
    %95 = vmatprep.subr.mxu0 0.0
    %96 = vmatpush1.msra.mxu0 %v69
    %97 = vmatprep.subr.mxu0 0.0
    %98 = vmatpush1.msra.mxu0 %v70
    %99 = vmatprep.subr.mxu0 0.0
    %100 = vmatpush1.msra.mxu0 %v71
    %101 = vmatprep.subr.mxu0 0.0
    %102 = vmatpush1.msra.mxu0 %v72
    %103 = vmatprep.subr.mxu0 0.0
    %104 = vmatpush1.msra.mxu0 %v73
    %105 = vmatprep.subr.mxu0 0.0
    %106 = vmatpush1.msra.mxu0 %v74
    %107 = vmatprep.subr.mxu0 0.0
    %108 = vmatpush1.msra.mxu0 %v75
    %109 = vmatprep.subr.mxu0 0.0
    %110 = vmatpush1.msra.mxu0 %v76
    %111 = vmatprep.subr.mxu0 0.0
    %112 = vmatpush1.msra.mxu0 %v77
    %113 = vmatprep.subr.mxu0 0.0
    %114 = vmatpush1.msra.mxu0 %v78
    %115 = vmatprep.subr.mxu0 0.0
    %116 = vmatpush1.msra.mxu0 %v79
    %117 = vmatprep.subr.mxu0 0.0
    %118 = vmatpush1.msra.mxu0 %v80
    %119 = vmatprep.subr.mxu0 0.0
    %120 = vmatpush1.msra.mxu0 %v81
    %121 = vmatprep.subr.mxu0 0.0
    %122 = vmatpush1.msra.mxu0 0.0
    %123 = vmatprep.subr.mxu0 0.0
    %124 = vmatpush1.msra.mxu0 0.0
    %125 = vmatprep.subr.mxu0 0.0
    %126 = vmatpush1.msra.mxu0 0.0
    %127 = vmatprep.subr.mxu0 0.0
    %128 = vmatpush1.msra.mxu0 0.0
    %129 = vmatprep.subr.mxu0 0.0
    %130 = vmatpush1.msra.mxu0 0.0
    %131 = vmatprep.subr.mxu0 0.0
    %132 = vmatpush1.msra.mxu0 0.0
    %133 = vmatprep.subr.mxu0 0.0
    %134 = vmatpush1.msra.mxu0 0.0
    %135 = vmatprep.subr.mxu0 0.0
    %136 = vmatpush1.msra.mxu0 0.0
    %137 = vmatprep.subr.mxu0 0.0
    %138 = vmatpush1.msra.mxu0 0.0
    %139 = vmatprep.subr.mxu0 0.0
    %140 = vmatpush1.msra.mxu0 0.0
    %141 = vmatprep.subr.mxu0 0.0
    %142 = vmatpush1.msra.mxu0 0.0
    %143 = vmatprep.subr.mxu0 0.0
    %144 = vmatpush1.msra.mxu0 0.0
    %145 = vmatprep.subr.mxu0 0.0
    %146 = vmatpush1.msra.mxu0 0.0
    %147 = vmatprep.subr.mxu0 0.0
    %148 = vmatpush1.msra.mxu0 0.0
    %149 = vmatprep.subr.mxu0 0.0
    %150 = vmatpush1.msra.mxu0 0.0
    %151 = vmatprep.subr.mxu0 0.0
    %152 = vmatpush1.msra.mxu0 0.0
    %153 = vmatprep.mubr.f32.mxu0 0.0
    %154 = vmatmul.mubr.f32.gmra.mrb[0].mxu0 %v65
    %v155 = vpop.f32.mrb[0].mxu0
    %v156 = vadd.f32 %v87, %v155
    %v157 = vpop.f32.mrb[0].mxu0
    %158 = vdwg.mxu0
    %v159 = vmul.f32 %v156, 0.5
    %v160 = vmul.f32 %v156, 0.70710677
    %v161 = verf.f32.pop %v160
    %v162 = vadd.f32 %v161, 1.0
    %v163 = vmul.f32 %v159, %v162
    %v164 = vld [vmem:[#allocation7] sm:$0xff]
    %v165 = vld [vmem:[#allocation7 + $0x8] sm:$0xff]
    %v166 = vld [vmem:[#allocation7 + $0x10] sm:$0xff]
    %v167 = vld [vmem:[#allocation7 + $0x18] sm:$0xff]
    %v168 = vld [vmem:[#allocation7 + $0x20] sm:$0xff]
    %v169 = vld [vmem:[#allocation7 + $0x28] sm:$0xff]
    %v170 = vld [vmem:[#allocation7 + $0x30] sm:$0xff]
    %v171 = vld [vmem:[#allocation7 + $0x38] sm:$0xff]
    %v172 = vld [vmem:[#allocation7 + $0x40] sm:$0xff]
    %v173 = vld [vmem:[#allocation7 + $0x48] sm:$0xff]
    %v174 = vld [vmem:[#allocation7 + $0x50] sm:$0xff]
    %v175 = vld [vmem:[#allocation7 + $0x58] sm:$0xff]
    %v176 = vld [vmem:[#allocation7 + $0x60] sm:$0xff]
    %v177 = vld [vmem:[#allocation7 + $0x68] sm:$0xff]
    %v178 = vld [vmem:[#allocation7 + $0x70] sm:$0xff]
    %v179 = vld [vmem:[#allocation7 + $0x78] sm:$0xff]
    %v180 = vld [vmem:[%s4] sm:$0x1]
    %v182 = vlaneseq
    %v183 = vshrl.u32 %v182, 7
    %v184 = vsub.s32 0, %v183
    %v185 = vrot.slane %v180, %v184
    %187 = vmatprep.subr.mxu0 0.0
    %188 = vmatpush1.msra.mxu0 %v164
    %189 = vmatprep.subr.mxu0 0.0
    %190 = vmatpush1.msra.mxu0 %v165
    %191 = vmatprep.subr.mxu0 0.0
    %192 = vmatpush1.msra.mxu0 %v166
    %193 = vmatprep.subr.mxu0 0.0
    %194 = vmatpush1.msra.mxu0 %v167
    %195 = vmatprep.subr.mxu0 0.0
    %196 = vmatpush1.msra.mxu0 %v168
    %197 = vmatprep.subr.mxu0 0.0
    %198 = vmatpush1.msra.mxu0 %v169
    %199 = vmatprep.subr.mxu0 0.0
    %200 = vmatpush1.msra.mxu0 %v170
    %201 = vmatprep.subr.mxu0 0.0
    %202 = vmatpush1.msra.mxu0 %v171
    %203 = vmatprep.subr.mxu0 0.0
    %204 = vmatpush1.msra.mxu0 %v172
    %205 = vmatprep.subr.mxu0 0.0
    %206 = vmatpush1.msra.mxu0 %v173
    %207 = vmatprep.subr.mxu0 0.0
    %208 = vmatpush1.msra.mxu0 %v174
    %209 = vmatprep.subr.mxu0 0.0
    %210 = vmatpush1.msra.mxu0 %v175
    %211 = vmatprep.subr.mxu0 0.0
    %212 = vmatpush1.msra.mxu0 %v176
    %213 = vmatprep.subr.mxu0 0.0
    %214 = vmatpush1.msra.mxu0 %v177
    %215 = vmatprep.subr.mxu0 0.0
    %216 = vmatpush1.msra.mxu0 %v178
    %217 = vmatprep.subr.mxu0 0.0
    %218 = vmatpush1.msra.mxu0 %v179
    %219 = vmatprep.subr.mxu0 0.0
    %220 = vmatpush1.msra.mxu0 0.0
    %221 = vmatprep.subr.mxu0 0.0
    %222 = vmatpush1.msra.mxu0 0.0
    %223 = vmatprep.subr.mxu0 0.0
    %224 = vmatpush1.msra.mxu0 0.0
    %225 = vmatprep.subr.mxu0 0.0
    %226 = vmatpush1.msra.mxu0 0.0
    %227 = vmatprep.subr.mxu0 0.0
    %228 = vmatpush1.msra.mxu0 0.0
    %229 = vmatprep.subr.mxu0 0.0
    %230 = vmatpush1.msra.mxu0 0.0
    %231 = vmatprep.subr.mxu0 0.0
    %232 = vmatpush1.msra.mxu0 0.0
    %233 = vmatprep.subr.mxu0 0.0
    %234 = vmatpush1.msra.mxu0 0.0
    %235 = vmatprep.subr.mxu0 0.0
    %236 = vmatpush1.msra.mxu0 0.0
    %237 = vmatprep.subr.mxu0 0.0
    %238 = vmatpush1.msra.mxu0 0.0
    %239 = vmatprep.subr.mxu0 0.0
    %240 = vmatpush1.msra.mxu0 0.0
    %241 = vmatprep.subr.mxu0 0.0
    %242 = vmatpush1.msra.mxu0 0.0
    %243 = vmatprep.subr.mxu0 0.0
    %244 = vmatpush1.msra.mxu0 0.0
    %245 = vmatprep.subr.mxu0 0.0
    %246 = vmatpush1.msra.mxu0 0.0
    %247 = vmatprep.subr.mxu0 0.0
    %248 = vmatpush1.msra.mxu0 0.0
    %249 = vmatprep.subr.mxu0 0.0
    %250 = vmatpush1.msra.mxu0 0.0
    %251 = vmatprep.mubr.f32.mxu0 0.0
    %252 = vmatmul.mubr.f32.gmra.mrb[0].mxu0 %v163
    %v253 = vpop.f32.mrb[0].mxu0
    %v254 = vadd.f32 %v185, %v253
    %v255 = vpop.f32.mrb[0].mxu0
    %256 = vdwg.mxu0
    %v257 = vadd.f32 %v254, %v60
    %258 = vst [vmem:[#allocation8] sm:$0xf] %v257
    // Predicated region
    $region34: #{tpu_custom_call.1} parent=1 // pred_check
      _
    $region35: #{tpu_custom_call.1} parent=1 // pred_check_branch
      %260 = sbr.rel (0) target = $region37
    $region36: #{tpu_custom_call.1} parent=1 // pred_region
      %s262 = ssub.s32 64, 64
      %263 = vsyncadd [#allocation4], %s262
      %s265 = sshll.u32 [#allocation8], 4
      %s266 = int_to_ptr.vmem [resolvable:$true] %s265
      %268 = dma.vmem_to_hbm [thread:$0]  %s266, 64, %s5, [#allocation4]
    $region37: #{tpu_custom_call.1} parent=1 // pred_fallthru
      _
    // Predicated region
    $region38: #{tpu_custom_call.1} parent=1 // pred_check
      _
    $region39: #{tpu_custom_call.1} parent=1 // pred_check_branch
      %270 = sbr.rel (0) target = $region41
    $region40: #{tpu_custom_call.1} parent=1 // pred_region
      %271 = dma.done [#allocation4], 64
    $region41: #{tpu_custom_call.1} parent=1 // pred_fallthru
      _
    %272 = vsyncpa [#allocation3], 1
    %273 = vsyncpa [#allocation6], 1
    %274 = vsyncpa [#allocation4], 1

// kernel: tpu_custom_call.1
$region0: #{tpu_custom_call.1}
  #allocation0 [shape = 'u32[]', space=smem, size = 0x4, offset = 0x4, fixed_abs, tag = 'smem constant byte address 0x4 - core index']
  #allocation1 [shape = 'u32[144,128]{1,0:T(1,128)}', space=vmem, size = 0x12000, scoped, tag = 'internal scratch']
  %s0 = inlined_call_operand.hbm [shape: f32[4,128], index: 0, kind: input, shape index: {}]
  %s1 = inlined_call_operand.hbm [shape: f32[128,128], index: 1, kind: input, shape index: {}]
  %s2 = inlined_call_operand.vmem [shape: f32[1,128], index: 2, kind: input, shape index: {}]
  %s3 = inlined_call_operand.hbm [shape: f32[128,128], index: 3, kind: input, shape index: {}]
  %s4 = inlined_call_operand.vmem [shape: f32[1,128], index: 4, kind: input, shape index: {}]
  %s5 = inlined_call_operand.hbm [shape: f32[4,128], index: 5, kind: output, shape index: {}]
  %s6 = sld [smem:[#allocation0]]
  $region42: #{tpu_custom_call.1} parent=0
    _
  %s8 = ssub.s32 1, %s6
  %s9 = scalar_select 0, %s8, %s6
  $region1: #{tpu_custom_call.1} parent=0
    #allocation2 [shape = 'u8[2048]{0}', space=vmem, size = 0x800, scoped, tag = 'input window, operand 0, single buffered']
    #allocation3 [shape = 's32[1]{0}', space=sflag, size = 0x4, scoped, tag = 'scoped memory for tpu_custom_call.1']
    #allocation4 [shape = 's32[1]{0}', space=sflag, size = 0x4, scoped, tag = 'scoped memory for tpu_custom_call.1']
    #allocation5 [shape = 'u8[65536]{0}', space=vmem, size = 0x10000, scoped, tag = 'input window, operand 1, single buffered']
    #allocation6 [shape = 's32[1]{0}', space=sflag, size = 0x4, scoped, tag = 'scoped memory for tpu_custom_call.1']
    #allocation7 [shape = 'u8[65536]{0}', space=vmem, size = 0x10000, scoped, tag = 'input window, operand 3, single buffered']
    #allocation8 [shape = 'u8[2048]{0}', space=vmem, size = 0x800, scoped, tag = 'output window, operand 0, single buffered']
    %10 = vsyncpa [#allocation3], 0
    %11 = vsyncpa [#allocation6], 0
    %12 = vsyncpa [#allocation4], 0
    // Predicated region
    $region2: #{tpu_custom_call.1} parent=1 // pred_check
      _
    $region3: #{tpu_custom_call.1} parent=1 // pred_check_branch
      %14 = sbr.rel (0) target = $region5
    $region4: #{tpu_custom_call.1} parent=1 // pred_region
      %s16 = ssub.s32 64, 64
      %17 = vsyncadd [#allocation3], %s16
      %s19 = sshll.u32 [#allocation2], 4
      %s20 = int_to_ptr.vmem [resolvable:$true] %s19
      %22 = dma.hbm_to_vmem [thread:$0]  %s0, 64, %s20, [#allocation3]
    $region5: #{tpu_custom_call.1} parent=1 // pred_fallthru
      _
    // Predicated region
    $region6: #{tpu_custom_call.1} parent=1 // pred_check
      _
    $region7: #{tpu_custom_call.1} parent=1 // pred_check_branch
      %24 = sbr.rel (0) target = $region9
    $region8: #{tpu_custom_call.1} parent=1 // pred_region
      %s26 = ssub.s32 2048, 2048
      %27 = vsyncadd [#allocation6], %s26
      %s28 = sshll.u32 [#allocation5], 4
      %s29 = int_to_ptr.vmem [resolvable:$true] %s28
      %34 = dma.hbm_to_vmem [thread:$0]  %s1, 2048, %s29, [#allocation6], 128, 128, 8
    $region9: #{tpu_custom_call.1} parent=1 // pred_fallthru
      _
    // Predicated region
    $region10: #{tpu_custom_call.1} parent=1 // pred_check
      _
    $region11: #{tpu_custom_call.1} parent=1 // pred_check_branch
      %36 = sbr.rel (0) target = $region13
    $region12: #{tpu_custom_call.1} parent=1 // pred_region
      _
    $region13: #{tpu_custom_call.1} parent=1 // pred_fallthru
      _
    // Predicated region
    $region14: #{tpu_custom_call.1} parent=1 // pred_check
      _
    $region15: #{tpu_custom_call.1} parent=1 // pred_check_branch
      %38 = sbr.rel (0) target = $region17
    $region16: #{tpu_custom_call.1} parent=1 // pred_region
      %s40 = ssub.s32 2048, 2048
      %41 = vsyncadd [#allocation6], %s40
      %s42 = sshll.u32 [#allocation7], 4
      %s43 = int_to_ptr.vmem [resolvable:$true] %s42
      %48 = dma.hbm_to_vmem [thread:$0]  %s3, 2048, %s43, [#allocation6], 128, 128, 8
    $region17: #{tpu_custom_call.1} parent=1 // pred_fallthru
      _
    // Predicated region
    $region18: #{tpu_custom_call.1} parent=1 // pred_check
      _
    $region19: #{tpu_custom_call.1} parent=1 // pred_check_branch
      %50 = sbr.rel (0) target = $region21
    $region20: #{tpu_custom_call.1} parent=1 // pred_region
      _
    $region21: #{tpu_custom_call.1} parent=1 // pred_fallthru
      _
    // Predicated region
    $region22: #{tpu_custom_call.1} parent=1 // pred_check
      _
    $region23: #{tpu_custom_call.1} parent=1 // pred_check_branch
      %52 = sbr.rel (0) target = $region25
    $region24: #{tpu_custom_call.1} parent=1 // pred_region
      %53 = dma.done [#allocation3], 64
    $region25: #{tpu_custom_call.1} parent=1 // pred_fallthru
      _
    // Predicated region
    $region26: #{tpu_custom_call.1} parent=1 // pred_check
      _
    $region27: #{tpu_custom_call.1} parent=1 // pred_check_branch
      %55 = sbr.rel (0) target = $region29
    $region28: #{tpu_custom_call.1} parent=1 // pred_region
      %56 = dma.done [#allocation6], 2048
    $region29: #{tpu_custom_call.1} parent=1 // pred_fallthru
      _
    // Predicated region
    $region30: #{tpu_custom_call.1} parent=1 // pred_check
      _
    $region31: #{tpu_custom_call.1} parent=1 // pred_check_branch
      %58 = sbr.rel (0) target = $region33
    $region32: #{tpu_custom_call.1} parent=1 // pred_region
      %59 = dma.done [#allocation6], 2048
    $region33: #{tpu_custom_call.1} parent=1 // pred_fallthru
      _
    %v60 = vld [vmem:[#allocation2] sm:$0xf]
    %v61 = vmul.f32 %v60, 0.5
    %v62 = vmul.f32 %v60, 0.70710677
    %v63 = verf.f32.pop %v62
    %v64 = vadd.f32 %v63, 1.0
    %v65 = vmul.f32 %v61, %v64
    %v66 = vld [vmem:[#allocation5] sm:$0xff]
    %v67 = vld [vmem:[#allocation5 + $0x8] sm:$0xff]
    %v68 = vld [vmem:[#allocation5 + $0x10] sm:$0xff]
    %v69 = vld [vmem:[#allocation5 + $0x18] sm:$0xff]
    %v70 = vld [vmem:[#allocation5 + $0x20] sm:$0xff]
    %v71 = vld [vmem:[#allocation5 + $0x28] sm:$0xff]
    %v72 = vld [vmem:[#allocation5 + $0x30] sm:$0xff]
    %v73 = vld [vmem:[#allocation5 + $0x38] sm:$0xff]
    %v74 = vld [vmem:[#allocation5 + $0x40] sm:$0xff]
    %v75 = vld [vmem:[#allocation5 + $0x48] sm:$0xff]
    %v76 = vld [vmem:[#allocation5 + $0x50] sm:$0xff]
    %v77 = vld [vmem:[#allocation5 + $0x58] sm:$0xff]
    %v78 = vld [vmem:[#allocation5 + $0x60] sm:$0xff]
    %v79 = vld [vmem:[#allocation5 + $0x68] sm:$0xff]
    %v80 = vld [vmem:[#allocation5 + $0x70] sm:$0xff]
    %v81 = vld [vmem:[#allocation5 + $0x78] sm:$0xff]
    %v82 = vld [vmem:[%s2] sm:$0x1]
    %v84 = vlaneseq
    %v85 = vshrl.u32 %v84, 7
    %v86 = vsub.s32 0, %v85
    %v87 = vrot.slane %v82, %v86
    %89 = vmatprep.subr.mxu0 0.0
    %90 = vmatpush1.msra.mxu0 %v66
    %91 = vmatprep.subr.mxu0 0.0
    %92 = vmatpush1.msra.mxu0 %v67
    %93 = vmatprep.subr.mxu0 0.0
    %94 = vmatpush1.msra.mxu0 %v68
    %95 = vmatprep.subr.mxu0 0.0
    %96 = vmatpush1.msra.mxu0 %v69
    %97 = vmatprep.subr.mxu0 0.0
    %98 = vmatpush1.msra.mxu0 %v70
    %99 = vmatprep.subr.mxu0 0.0
    %100 = vmatpush1.msra.mxu0 %v71
    %101 = vmatprep.subr.mxu0 0.0
    %102 = vmatpush1.msra.mxu0 %v72
    %103 = vmatprep.subr.mxu0 0.0
    %104 = vmatpush1.msra.mxu0 %v73
    %105 = vmatprep.subr.mxu0 0.0
    %106 = vmatpush1.msra.mxu0 %v74
    %107 = vmatprep.subr.mxu0 0.0
    %108 = vmatpush1.msra.mxu0 %v75
    %109 = vmatprep.subr.mxu0 0.0
    %110 = vmatpush1.msra.mxu0 %v76
    %111 = vmatprep.subr.mxu0 0.0
    %112 = vmatpush1.msra.mxu0 %v77
    %113 = vmatprep.subr.mxu0 0.0
    %114 = vmatpush1.msra.mxu0 %v78
    %115 = vmatprep.subr.mxu0 0.0
    %116 = vmatpush1.msra.mxu0 %v79
    %117 = vmatprep.subr.mxu0 0.0
    %118 = vmatpush1.msra.mxu0 %v80
    %119 = vmatprep.subr.mxu0 0.0
    %120 = vmatpush1.msra.mxu0 %v81
    %121 = vmatprep.subr.mxu0 0.0
    %122 = vmatpush1.msra.mxu0 0.0
    %123 = vmatprep.subr.mxu0 0.0
    %124 = vmatpush1.msra.mxu0 0.0
    %125 = vmatprep.subr.mxu0 0.0
    %126 = vmatpush1.msra.mxu0 0.0
    %127 = vmatprep.subr.mxu0 0.0
    %128 = vmatpush1.msra.mxu0 0.0
    %129 = vmatprep.subr.mxu0 0.0
    %130 = vmatpush1.msra.mxu0 0.0
    %131 = vmatprep.subr.mxu0 0.0
    %132 = vmatpush1.msra.mxu0 0.0
    %133 = vmatprep.subr.mxu0 0.0
    %134 = vmatpush1.msra.mxu0 0.0
    %135 = vmatprep.subr.mxu0 0.0
    %136 = vmatpush1.msra.mxu0 0.0
    %137 = vmatprep.subr.mxu0 0.0
    %138 = vmatpush1.msra.mxu0 0.0
    %139 = vmatprep.subr.mxu0 0.0
    %140 = vmatpush1.msra.mxu0 0.0
    %141 = vmatprep.subr.mxu0 0.0
    %142 = vmatpush1.msra.mxu0 0.0
    %143 = vmatprep.subr.mxu0 0.0
    %144 = vmatpush1.msra.mxu0 0.0
    %145 = vmatprep.subr.mxu0 0.0
    %146 = vmatpush1.msra.mxu0 0.0
    %147 = vmatprep.subr.mxu0 0.0
    %148 = vmatpush1.msra.mxu0 0.0
    %149 = vmatprep.subr.mxu0 0.0
    %150 = vmatpush1.msra.mxu0 0.0
    %151 = vmatprep.subr.mxu0 0.0
    %152 = vmatpush1.msra.mxu0 0.0
    %153 = vmatprep.mubr.f32.mxu0 0.0
    %154 = vmatmul.mubr.f32.gmra.mrb[0].mxu0 %v65
    %v155 = vpop.f32.mrb[0].mxu0
    %v156 = vadd.f32 %v87, %v155
    %v157 = vpop.f32.mrb[0].mxu0
    %158 = vdwg.mxu0
    %v159 = vmul.f32 %v156, 0.5
    %v160 = vmul.f32 %v156, 0.70710677
    %v161 = verf.f32.pop %v160
    %v162 = vadd.f32 %v161, 1.0
    %v163 = vmul.f32 %v159, %v162
    %v164 = vld [vmem:[#allocation7] sm:$0xff]
    %v165 = vld [vmem:[#allocation7 + $0x8] sm:$0xff]
    %v166 = vld [vmem:[#allocation7 + $0x10] sm:$0xff]
    %v167 = vld [vmem:[#allocation7 + $0x18] sm:$0xff]
    %v168 = vld [vmem:[#allocation7 + $0x20] sm:$0xff]
    %v169 = vld [vmem:[#allocation7 + $0x28] sm:$0xff]
    %v170 = vld [vmem:[#allocation7 + $0x30] sm:$0xff]
    %v171 = vld [vmem:[#allocation7 + $0x38] sm:$0xff]
    %v172 = vld [vmem:[#allocation7 + $0x40] sm:$0xff]
    %v173 = vld [vmem:[#allocation7 + $0x48] sm:$0xff]
    %v174 = vld [vmem:[#allocation7 + $0x50] sm:$0xff]
    %v175 = vld [vmem:[#allocation7 + $0x58] sm:$0xff]
    %v176 = vld [vmem:[#allocation7 + $0x60] sm:$0xff]
    %v177 = vld [vmem:[#allocation7 + $0x68] sm:$0xff]
    %v178 = vld [vmem:[#allocation7 + $0x70] sm:$0xff]
    %v179 = vld [vmem:[#allocation7 + $0x78] sm:$0xff]
    %v180 = vld [vmem:[%s4] sm:$0x1]
    %v182 = vlaneseq
    %v183 = vshrl.u32 %v182, 7
    %v184 = vsub.s32 0, %v183
    %v185 = vrot.slane %v180, %v184
    %187 = vmatprep.subr.mxu0 0.0
    %188 = vmatpush1.msra.mxu0 %v164
    %189 = vmatprep.subr.mxu0 0.0
    %190 = vmatpush1.msra.mxu0 %v165
    %191 = vmatprep.subr.mxu0 0.0
    %192 = vmatpush1.msra.mxu0 %v166
    %193 = vmatprep.subr.mxu0 0.0
    %194 = vmatpush1.msra.mxu0 %v167
    %195 = vmatprep.subr.mxu0 0.0
    %196 = vmatpush1.msra.mxu0 %v168
    %197 = vmatprep.subr.mxu0 0.0
    %198 = vmatpush1.msra.mxu0 %v169
    %199 = vmatprep.subr.mxu0 0.0
    %200 = vmatpush1.msra.mxu0 %v170
    %201 = vmatprep.subr.mxu0 0.0
    %202 = vmatpush1.msra.mxu0 %v171
    %203 = vmatprep.subr.mxu0 0.0
    %204 = vmatpush1.msra.mxu0 %v172
    %205 = vmatprep.subr.mxu0 0.0
    %206 = vmatpush1.msra.mxu0 %v173
    %207 = vmatprep.subr.mxu0 0.0
    %208 = vmatpush1.msra.mxu0 %v174
    %209 = vmatprep.subr.mxu0 0.0
    %210 = vmatpush1.msra.mxu0 %v175
    %211 = vmatprep.subr.mxu0 0.0
    %212 = vmatpush1.msra.mxu0 %v176
    %213 = vmatprep.subr.mxu0 0.0
    %214 = vmatpush1.msra.mxu0 %v177
    %215 = vmatprep.subr.mxu0 0.0
    %216 = vmatpush1.msra.mxu0 %v178
    %217 = vmatprep.subr.mxu0 0.0
    %218 = vmatpush1.msra.mxu0 %v179
    %219 = vmatprep.subr.mxu0 0.0
    %220 = vmatpush1.msra.mxu0 0.0
    %221 = vmatprep.subr.mxu0 0.0
    %222 = vmatpush1.msra.mxu0 0.0
    %223 = vmatprep.subr.mxu0 0.0
    %224 = vmatpush1.msra.mxu0 0.0
    %225 = vmatprep.subr.mxu0 0.0
    %226 = vmatpush1.msra.mxu0 0.0
    %227 = vmatprep.subr.mxu0 0.0
    %228 = vmatpush1.msra.mxu0 0.0
    %229 = vmatprep.subr.mxu0 0.0
    %230 = vmatpush1.msra.mxu0 0.0
    %231 = vmatprep.subr.mxu0 0.0
    %232 = vmatpush1.msra.mxu0 0.0
    %233 = vmatprep.subr.mxu0 0.0
    %234 = vmatpush1.msra.mxu0 0.0
    %235 = vmatprep.subr.mxu0 0.0
    %236 = vmatpush1.msra.mxu0 0.0
    %237 = vmatprep.subr.mxu0 0.0
    %238 = vmatpush1.msra.mxu0 0.0
    %239 = vmatprep.subr.mxu0 0.0
    %240 = vmatpush1.msra.mxu0 0.0
    %241 = vmatprep.subr.mxu0 0.0
    %242 = vmatpush1.msra.mxu0 0.0
    %243 = vmatprep.subr.mxu0 0.0
    %244 = vmatpush1.msra.mxu0 0.0
    %245 = vmatprep.subr.mxu0 0.0
    %246 = vmatpush1.msra.mxu0 0.0
    %247 = vmatprep.subr.mxu0 0.0
    %248 = vmatpush1.msra.mxu0 0.0
    %249 = vmatprep.subr.mxu0 0.0
    %250 = vmatpush1.msra.mxu0 0.0
    %251 = vmatprep.mubr.f32.mxu0 0.0
    %252 = vmatmul.mubr.f32.gmra.mrb[0].mxu0 %v163
    %v253 = vpop.f32.mrb[0].mxu0
    %v254 = vadd.f32 %v185, %v253
    %v255 = vpop.f32.mrb[0].mxu0
    %256 = vdwg.mxu0
    %v257 = vadd.f32 %v254, %v60
    %258 = vst [vmem:[#allocation8] sm:$0xf] %v257
    // Predicated region
    $region34: #{tpu_custom_call.1} parent=1 // pred_check
      _
    $region35: #{tpu_custom_call.1} parent=1 // pred_check_branch
      %260 = sbr.rel (0) target = $region37
    $region36: #{tpu_custom_call.1} parent=1 // pred_region
      %s262 = ssub.s32 64, 64
      %263 = vsyncadd [#allocation4], %s262
      %s265 = sshll.u32 [#allocation8], 4
      %s266 = int_to_ptr.vmem [resolvable:$true] %s265
      %268 = dma.vmem_to_hbm [thread:$0]  %s266, 64, %s5, [#allocation4]
    $region37: #{tpu_custom_call.1} parent=1 // pred_fallthru
      _
    // Predicated region
    $region38: #{tpu_custom_call.1} parent=1 // pred_check
      _
    $region39: #{tpu_custom_call.1} parent=1 // pred_check_branch
      %270 = sbr.rel (0) target = $region41
    $region40: #{tpu_custom_call.1} parent=1 // pred_region
      %271 = dma.done [#allocation4], 64
    $region41: #{tpu_custom_call.1} parent=1 // pred_fallthru
      _
    %272 = vsyncpa [#allocation3], 1
    %273 = vsyncpa [#allocation6], 1
    %274 = vsyncpa [#allocation4], 1

</llo_original>
